<compile_context>
chip_gen: v7x
topology: tpu7x:2x2x1
jax: 0.10.0
libtpu: 0.0.40
codegen_flags: <defaults>
</compile_context>

<pallas_src>
import jax
import jax.numpy as jnp
from jax import lax
from jax.experimental import pallas as pl
from jax.experimental.pallas import tpu as pltpu


def _round_up(n, m):
    return ((n + m - 1) // m) * m


def _make_clf_kernel(*, B, H, MT, K):
    """Builds the single-shot kernel for static batch B, hidden H, batch tile MT,
    and K gather-DMAs in flight."""

    def kernel(idx_ref, x_hbm, w1_hbm, b1_hbm, w2_hbm, b2_hbm, w3_hbm, b3_ref,
               out_ref,
               last_v, w1_v, b1_v, w2_v, b2_v, w3_v, gsem, wsem):
        # idx_ref : (B,) int32 SMEM  flat row index of last valid timestep
        # x_hbm   : (T*B, H) HBM     encoder outputs (raw ref, manual DMA)
        # w*_hbm  : padded weights/biases in HBM (raw refs, manual DMA)
        # b3_ref  : (1,) f32 SMEM    clf bias
        # out_ref : (1, B_pad) f32   lane-dense logits
        # last_v  : (B_pad, H)       VMEM scratch for gathered rows
        # w*_v    : VMEM scratch for the resident weights (single-buffered)
        # gsem    : (K,) DMA sems    gather pipeline
        # wsem    : (5,) DMA sems    weight copies
        B_pad = last_v.shape[0]

        # ---- 1) kick off the resident-weight DMAs (HBM -> VMEM, once) -------
        weight_copies = [
            pltpu.make_async_copy(w1_hbm, w1_v, wsem.at[0]),
            pltpu.make_async_copy(b1_hbm, b1_v, wsem.at[1]),
            pltpu.make_async_copy(w2_hbm, w2_v, wsem.at[2]),
            pltpu.make_async_copy(b2_hbm, b2_v, wsem.at[3]),
            pltpu.make_async_copy(w3_hbm, w3_v, wsem.at[4]),
        ]
        for c in weight_copies:
            c.start()

        # ---- 2) zero the batch-padding rows the gather never writes ---------
        if B_pad > B:
            last_v[pl.ds(B, B_pad - B), :] = jnp.zeros(
                (B_pad - B, last_v.shape[1]), last_v.dtype)

        # ---- 3) gather: last valid timestep per batch row, K DMAs in flight --
        def row_copy(i, slot):
            return pltpu.make_async_copy(
                x_hbm.at[pl.ds(idx_ref[i], 1), :],
                last_v.at[pl.ds(i, 1), :],
                gsem.at[slot])

        for i in range(min(K, B)):           # prime the DMA pipeline (static)
            row_copy(i, i).start()

        def gather_step(i, carry):
            slot = i % K
            row_copy(i, slot).wait()          # copy i done -> slot free

            @pl.when(i + K < B)
            def _():
                row_copy(i + K, slot).start() # keep K copies in flight
            return carry

        lax.fori_loop(0, B, gather_step, 0)

        # ---- 4) wait for the weights, run the MLP once over batch tiles -----
        for c in weight_copies:
            c.wait()

        # TODO(synk): nn.Dropout(p=0.1) omitted — eval-mode identity (training
        # parity would need pltpu.prng_seed + a Bernoulli mask).

        w_dt = w1_v.dtype                     # f32 or bf16 MXU storage dtype
        for m0 in range(0, B_pad, MT):        # static loop; usually one tile
            mt = min(MT, B_pad - m0)
            rows = last_v[pl.ds(m0, mt), :]   # (mt, H)

            # layer1 + LeakyReLU(0.01)
            h1 = jnp.dot(rows.astype(w_dt), w1_v[...],
                         preferred_element_type=jnp.float32) + b1_v[...]
            h1 = jnp.where(h1 > 0, h1, 0.01 * h1)          # (mt, D1p) f32

            # layer2 + LeakyReLU(0.01)   (bf16 path: activations cast too)
            h2 = jnp.dot(h1.astype(w_dt), w2_v[...],
                         preferred_element_type=jnp.float32) + b2_v[...]
            h2 = jnp.where(h2 > 0, h2, 0.01 * h2)          # (mt, D2p) f32

            # clf: Linear(D2, 1) as a lane reduction; bias from SMEM.
            logits = jnp.sum(h2 * w3_v[...], axis=-1, keepdims=True) + b3_ref[0]
            out_ref[:, pl.ds(m0, mt)] = jnp.transpose(logits).astype(out_ref.dtype)

    return kernel


def prepare_params(params, *, weight_dtype=jnp.float32):
    """One-time weight preparation: transpose to (in, out), zero-pad lane dims to
    multiples of 128 (mathematically exact: pads are zero), cast matmul weights
    to `weight_dtype` (bf16 recommended on v5e/v6e/v7x; fp8 on v7x is a further
    option, with per-channel scales folded into the f32 bias add)."""
    w1, b1, w2, b2, w3, b3 = params
    H = w1.shape[0]
    H2 = w2.shape[0]
    D1p = _round_up(H, 128)
    D2p = _round_up(H2, 128)

    w1_t = jnp.zeros((H, D1p), weight_dtype).at[:, :H].set(w1.T.astype(weight_dtype))
    b1_r = jnp.zeros((1, D1p), jnp.float32).at[:, :H].set(b1.astype(jnp.float32))
    w2_t = jnp.zeros((D1p, D2p), weight_dtype).at[:H, :H2].set(w2.T.astype(weight_dtype))
    b2_r = jnp.zeros((1, D2p), jnp.float32).at[:, :H2].set(b2.astype(jnp.float32))
    w3_r = jnp.zeros((1, D2p), jnp.float32).at[:, :H2].set(
        w3.reshape(1, H2).astype(jnp.float32))
    b3_r = b3.reshape(1).astype(jnp.float32)
    return (w1_t, b1_r, w2_t, b2_r, w3_r, b3_r)


def _vmem_limit_bytes(B_pad, H, D1p, D2p, MT, x_dtype, w_dtype):
    """Explicit scoped-VMEM budget: scratch buffers + output block + headroom."""
    def buf(shape, dtype):
        r = _round_up(shape[0], 8)
        c = _round_up(shape[1], 128)
        return r * c * jnp.dtype(dtype).itemsize

    total = (buf((B_pad, H), x_dtype)
             + buf((H, D1p), w_dtype) + buf((1, D1p), jnp.float32)
             + buf((D1p, D2p), w_dtype) + buf((1, D2p), jnp.float32)
             + buf((1, D2p), jnp.float32)
             + 2 * buf((1, B_pad), jnp.float32)      # pipelined output block
             + 2 * buf((MT, D1p), jnp.float32)       # h1 intermediate headroom
             + 2 * buf((MT, D2p), jnp.float32))      # h2 intermediate headroom
    return int(min(128 * 1024 * 1024, 2 * total + (4 << 20)))


def single_target_clf(encoder_outputs, encoder_input_lengths, prepared,
                      *, max_inflight_gathers=8, batch_tile=256):
    """encoder_outputs: (T, B, H); encoder_input_lengths: (B,) int;
    prepared: output of prepare_params(params)."""
    T, B, H = encoder_outputs.shape
    w1_t, b1_r, w2_t, b2_r, w3_r, b3_r = prepared
    D1p = w1_t.shape[1]
    D2p = w2_t.shape[1]

    B_pad = _round_up(B, 8)
    MT = min(_round_up(batch_tile, 8), B_pad)   # finalize-matmul batch tile
    K = max(1, min(max_inflight_gathers, B))    # gather DMAs in flight

    # Flat row index of each batch element's last valid timestep inside the
    # (T*B, H) view (layout-preserving reshape). Clamped to [0, T-1].
    last_t = jnp.clip(encoder_input_lengths.astype(jnp.int32) - 1, 0, T - 1)
    flat_idx = last_t * B + jnp.arange(B, dtype=jnp.int32)
    x2d = encoder_outputs.reshape(T * B, H)

    kernel = _make_clf_kernel(B=B, H=H, MT=MT, K=K)
    vmem_bytes = _vmem_limit_bytes(B_pad, H, D1p, D2p, MT,
                                   encoder_outputs.dtype, w1_t.dtype)

    grid_spec = pltpu.PrefetchScalarGridSpec(
        num_scalar_prefetch=1,               # flat_idx -> SMEM
        grid=(1,),                           # single invocation; gather via DMA
        in_specs=[
            pl.BlockSpec(memory_space=pl.ANY),                    # encoder rows
            pl.BlockSpec(memory_space=pl.ANY),                    # w1 (H, D1p)
            pl.BlockSpec(memory_space=pl.ANY),                    # b1 (1, D1p)
            pl.BlockSpec(memory_space=pl.ANY),                    # w2 (D1p, D2p)
            pl.BlockSpec(memory_space=pl.ANY),                    # b2 (1, D2p)
            pl.BlockSpec(memory_space=pl.ANY),                    # w3 (1, D2p)
            pl.BlockSpec(memory_space=pltpu.MemorySpace.SMEM),    # b3 scalar
        ],
        out_specs=pl.BlockSpec((1, B_pad), lambda i, idx: (0, 0)),
        scratch_shapes=[
            pltpu.VMEM((B_pad, H), encoder_outputs.dtype),   # gathered rows
            pltpu.VMEM((H, D1p), w1_t.dtype),                # resident weights
            pltpu.VMEM((1, D1p), jnp.float32),
            pltpu.VMEM((D1p, D2p), w2_t.dtype),
            pltpu.VMEM((1, D2p), jnp.float32),
            pltpu.VMEM((1, D2p), jnp.float32),
            pltpu.SemaphoreType.DMA((K,)),                   # gather sems
            pltpu.SemaphoreType.DMA((5,)),                   # weight sems
        ],
    )

    out = pl.pallas_call(
        kernel,
        out_shape=jax.ShapeDtypeStruct((1, B_pad), jnp.float32),
        grid_spec=grid_spec,
        compiler_params=pltpu.CompilerParams(
            dimension_semantics=("arbitrary",),
            vmem_limit_bytes=vmem_bytes),
    )(flat_idx, x2d, w1_t, b1_r, w2_t, b2_r, w3_r, b3_r)

    return out[0, :B]                         # drop batch padding -> (B,)


def init_params(key, hidden_size):
    """Deterministic init mirroring nn.Linear shapes (out, in)."""
    H, H2 = hidden_size, hidden_size // 2
    ks = jax.random.split(key, 6)
    u = lambda k, shape, fan_in: jax.random.uniform(
        k, shape, jnp.float32, -1.0 / jnp.sqrt(fan_in), 1.0 / jnp.sqrt(fan_in))
    w1 = u(ks[0], (H, H), H)
    b1 = u(ks[1], (H,), H)
    w2 = u(ks[2], (H2, H), H)
    b2 = u(ks[3], (H2,), H)
    w3 = u(ks[4], (1, H2), H2)
    b3 = u(ks[5], (1,), H2)
    return (w1, b1, w2, b2, w3, b3)


def _reference(encoder_outputs, lengths, params):
    """Pure-JAX reference of the PyTorch forward (eval mode)."""
    w1, b1, w2, b2, w3, b3 = params
    T, B, _ = encoder_outputs.shape
    idx = jnp.clip(lengths.astype(jnp.int32) - 1, 0, T - 1)
    last = encoder_outputs[idx, jnp.arange(B), :]
    h1 = last @ w1.T + b1
    h1 = jnp.where(h1 > 0, h1, 0.01 * h1)
    h2 = h1 @ w2.T + b2
    h2 = jnp.where(h2 > 0, h2, 0.01 * h2)
    return (h2 @ w3.T + b3)[:, 0]


if __name__ == "__main__":
    T, B, H = 8, 2, 32
    key = jax.random.PRNGKey(0)
    k_x, k_len, k_p, k_x2, k_len2 = jax.random.split(key, 5)

    encoder_outputs = jax.random.normal(k_x, (T, B, H), jnp.float32)
    encoder_input_lengths = jax.random.randint(k_len, (B,), 1, T + 1, jnp.int32)
    params = init_params(k_p, H)
    prepared_f32 = prepare_params(params)                      # prepared once

    # f32 weight storage: tight parity with the PyTorch module.
    ref = _reference(encoder_outputs, encoder_input_lengths, params)
    logits = single_target_clf(encoder_outputs, encoder_input_lengths, prepared_f32)
    logits = jax.block_until_ready(logits)
    assert logits.shape == (B,)
    assert jnp.allclose(logits, ref, atol=1e-5, rtol=1e-5), (logits, ref)

    # Larger batch (> in-flight DMA depth) to exercise the gather pipeline.
    B2 = 19
    enc2 = jax.random.normal(k_x2, (T, B2, H), jnp.float32)
    len2 = jax.random.randint(k_len2, (B2,), 1, T + 1, jnp.int32)
    ref2 = _reference(enc2, len2, params)
    out2 = jax.block_until_ready(single_target_clf(enc2, len2, prepared_f32))
    assert out2.shape == (B2,)
    assert jnp.allclose(out2, ref2, atol=1e-5, rtol=1e-5), (out2, ref2)

    # bf16 weight storage (recommended on v5e/v6e/v7x): looser tolerance.
    prepared_bf16 = prepare_params(params, weight_dtype=jnp.bfloat16)
    logits_bf16 = jax.block_until_ready(
        single_target_clf(encoder_outputs, encoder_input_lengths, prepared_bf16))
    assert jnp.allclose(logits_bf16, ref, atol=5e-2, rtol=5e-2), (logits_bf16, ref)

    print("KERNEL_OK")
</pallas_src>

<mosaic_0001>
module attributes {stable_mosaic.version = 11 : i64} {
  func.func @kernel(%arg0: i32, %arg1: memref<2xi32, #tpu.memory_space<smem>>, %arg2: memref<16x32xf32, #tpu.memory_space<any>>, %arg3: memref<32x128xf32, #tpu.memory_space<any>>, %arg4: memref<1x128xf32, #tpu.memory_space<any>>, %arg5: memref<128x128xf32, #tpu.memory_space<any>>, %arg6: memref<1x128xf32, #tpu.memory_space<any>>, %arg7: memref<1x128xf32, #tpu.memory_space<any>>, %arg8: memref<1xf32, #tpu.memory_space<smem>>, %arg9: memref<1x8xf32, #tpu.memory_space<vmem>>, %arg10: memref<8x32xf32, #tpu.memory_space<vmem>>, %arg11: memref<32x128xf32, #tpu.memory_space<vmem>>, %arg12: memref<1x128xf32, #tpu.memory_space<vmem>>, %arg13: memref<128x128xf32, #tpu.memory_space<vmem>>, %arg14: memref<1x128xf32, #tpu.memory_space<vmem>>, %arg15: memref<1x128xf32, #tpu.memory_space<vmem>>, %arg16: memref<2x!tpu.dma_semaphore, #tpu.memory_space<semaphore_mem>>, %arg17: memref<5x!tpu.dma_semaphore, #tpu.memory_space<semaphore_mem>>) attributes {dimension_semantics = [#tpu.dimension_semantics<arbitrary>], iteration_bounds = array<i64: 1>, scalar_prefetch = 1 : i64, scratch_operands = 8 : i64, tpu.core_type = #tpu.core_type<tc>, window_params = [{}, {}, {}, {}, {}, {}, {transform_indices = @transform_6, window_bounds = array<i64: 1>}, {pipeline_mode = #tpu.pipeline_mode<synchronous>, transform_indices = @transform_7, window_bounds = array<i64: 1, 8>}]} {
    %c0_i32 = arith.constant 0 : i32
    %0 = tpu.memref_slice %arg17[%c0_i32] : memref<5x!tpu.dma_semaphore, #tpu.memory_space<semaphore_mem>> -> memref<1x!tpu.dma_semaphore, #tpu.memory_space<semaphore_mem>>
    %1 = tpu.memref_squeeze %0 : memref<1x!tpu.dma_semaphore, #tpu.memory_space<semaphore_mem>> -> memref<!tpu.dma_semaphore, #tpu.memory_space<semaphore_mem>>
    tpu.enqueue_dma source(%arg3 : memref<32x128xf32, #tpu.memory_space<any>>) target(%arg11 : memref<32x128xf32, #tpu.memory_space<vmem>>) target_semaphore(%1 : memref<!tpu.dma_semaphore, #tpu.memory_space<semaphore_mem>>)
    %c1_i32 = arith.constant 1 : i32
    %2 = tpu.memref_slice %arg17[%c1_i32] : memref<5x!tpu.dma_semaphore, #tpu.memory_space<semaphore_mem>> -> memref<1x!tpu.dma_semaphore, #tpu.memory_space<semaphore_mem>>
    %3 = tpu.memref_squeeze %2 : memref<1x!tpu.dma_semaphore, #tpu.memory_space<semaphore_mem>> -> memref<!tpu.dma_semaphore, #tpu.memory_space<semaphore_mem>>
    tpu.enqueue_dma source(%arg4 : memref<1x128xf32, #tpu.memory_space<any>>) target(%arg12 : memref<1x128xf32, #tpu.memory_space<vmem>>) target_semaphore(%3 : memref<!tpu.dma_semaphore, #tpu.memory_space<semaphore_mem>>)
    %c2_i32 = arith.constant 2 : i32
    %4 = tpu.memref_slice %arg17[%c2_i32] : memref<5x!tpu.dma_semaphore, #tpu.memory_space<semaphore_mem>> -> memref<1x!tpu.dma_semaphore, #tpu.memory_space<semaphore_mem>>
    %5 = tpu.memref_squeeze %4 : memref<1x!tpu.dma_semaphore, #tpu.memory_space<semaphore_mem>> -> memref<!tpu.dma_semaphore, #tpu.memory_space<semaphore_mem>>
    tpu.enqueue_dma source(%arg5 : memref<128x128xf32, #tpu.memory_space<any>>) target(%arg13 : memref<128x128xf32, #tpu.memory_space<vmem>>) target_semaphore(%5 : memref<!tpu.dma_semaphore, #tpu.memory_space<semaphore_mem>>)
    %c3_i32 = arith.constant 3 : i32
    %6 = tpu.memref_slice %arg17[%c3_i32] : memref<5x!tpu.dma_semaphore, #tpu.memory_space<semaphore_mem>> -> memref<1x!tpu.dma_semaphore, #tpu.memory_space<semaphore_mem>>
    %7 = tpu.memref_squeeze %6 : memref<1x!tpu.dma_semaphore, #tpu.memory_space<semaphore_mem>> -> memref<!tpu.dma_semaphore, #tpu.memory_space<semaphore_mem>>
    tpu.enqueue_dma source(%arg6 : memref<1x128xf32, #tpu.memory_space<any>>) target(%arg14 : memref<1x128xf32, #tpu.memory_space<vmem>>) target_semaphore(%7 : memref<!tpu.dma_semaphore, #tpu.memory_space<semaphore_mem>>)
    %c4_i32 = arith.constant 4 : i32
    %8 = tpu.memref_slice %arg17[%c4_i32] : memref<5x!tpu.dma_semaphore, #tpu.memory_space<semaphore_mem>> -> memref<1x!tpu.dma_semaphore, #tpu.memory_space<semaphore_mem>>
    %9 = tpu.memref_squeeze %8 : memref<1x!tpu.dma_semaphore, #tpu.memory_space<semaphore_mem>> -> memref<!tpu.dma_semaphore, #tpu.memory_space<semaphore_mem>>
    tpu.enqueue_dma source(%arg7 : memref<1x128xf32, #tpu.memory_space<any>>) target(%arg15 : memref<1x128xf32, #tpu.memory_space<vmem>>) target_semaphore(%9 : memref<!tpu.dma_semaphore, #tpu.memory_space<semaphore_mem>>)
    %cst = arith.constant 0.000000e+00 : f32
    %10 = vector.broadcast %cst : f32 to vector<6x32xf32>
    %c2 = arith.constant 2 : index
    %c0 = arith.constant 0 : index
    %11 = vector.load %arg10[%c2, %c0] : memref<8x32xf32, #tpu.memory_space<vmem>>, vector<6x32xf32>
    tpu.vector_store %arg10[%c2, %c0], %10 {strides = array<i32>} : memref<8x32xf32, #tpu.memory_space<vmem>>, vector<6x32xf32>,
    %c0_0 = arith.constant 0 : index
    %12 = memref.load %arg1[%c0_0] : memref<2xi32, #tpu.memory_space<smem>>
    %c0_i32_1 = arith.constant 0 : i32
    %c0_i32_2 = arith.constant 0 : i32
    %13 = tpu.memref_slice %arg2[%12, %c0_i32_2] : memref<16x32xf32, #tpu.memory_space<any>> -> memref<1x32xf32, #tpu.memory_space<any>>
    %c0_i32_3 = arith.constant 0 : i32
    %c0_i32_4 = arith.constant 0 : i32
    %14 = tpu.memref_slice %arg10[%c0_i32_3, %c0_i32_4] : memref<8x32xf32, #tpu.memory_space<vmem>> -> memref<1x32xf32, #tpu.memory_space<vmem>>
    %15 = tpu.memref_slice %arg16[%c0_i32_1] : memref<2x!tpu.dma_semaphore, #tpu.memory_space<semaphore_mem>> -> memref<1x!tpu.dma_semaphore, #tpu.memory_space<semaphore_mem>>
    %16 = tpu.memref_squeeze %15 : memref<1x!tpu.dma_semaphore, #tpu.memory_space<semaphore_mem>> -> memref<!tpu.dma_semaphore, #tpu.memory_space<semaphore_mem>>
    tpu.enqueue_dma source(%13 : memref<1x32xf32, #tpu.memory_space<any>>) target(%14 : memref<1x32xf32, #tpu.memory_space<vmem>>) target_semaphore(%16 : memref<!tpu.dma_semaphore, #tpu.memory_space<semaphore_mem>>)
    %c1 = arith.constant 1 : index
    %17 = memref.load %arg1[%c1] : memref<2xi32, #tpu.memory_space<smem>>
    %c1_i32_5 = arith.constant 1 : i32
    %c0_i32_6 = arith.constant 0 : i32
    %18 = tpu.memref_slice %arg2[%17, %c0_i32_6] : memref<16x32xf32, #tpu.memory_space<any>> -> memref<1x32xf32, #tpu.memory_space<any>>
    %c1_i32_7 = arith.constant 1 : i32
    %c0_i32_8 = arith.constant 0 : i32
    %19 = tpu.memref_slice %arg10[%c1_i32_7, %c0_i32_8] : memref<8x32xf32, #tpu.memory_space<vmem>> -> memref<1x32xf32, #tpu.memory_space<vmem>>
    %20 = tpu.memref_slice %arg16[%c1_i32_5] : memref<2x!tpu.dma_semaphore, #tpu.memory_space<semaphore_mem>> -> memref<1x!tpu.dma_semaphore, #tpu.memory_space<semaphore_mem>>
    %21 = tpu.memref_squeeze %20 : memref<1x!tpu.dma_semaphore, #tpu.memory_space<semaphore_mem>> -> memref<!tpu.dma_semaphore, #tpu.memory_space<semaphore_mem>>
    tpu.enqueue_dma source(%18 : memref<1x32xf32, #tpu.memory_space<any>>) target(%19 : memref<1x32xf32, #tpu.memory_space<vmem>>) target_semaphore(%21 : memref<!tpu.dma_semaphore, #tpu.memory_space<semaphore_mem>>)
    %c0_i32_9 = arith.constant 0 : i32
    %c2_i32_10 = arith.constant 2 : i32
    %22 = arith.addi %c0_i32_9, %c2_i32_10 : i32
    %c1_i32_11 = arith.constant 1 : i32
    scf.for %arg18 = %c0_i32_9 to %22 step %c1_i32_11  : i32 {
      %c2_i32_40 = arith.constant 2 : i32
      %c0_i32_41 = arith.constant 0 : i32
      %64 = arith.cmpi eq, %c2_i32_40, %c0_i32_41 : i32
      %c1_i32_42 = arith.constant 1 : i32
      %65 = arith.select %64, %c1_i32_42, %c2_i32_40 : i32
      %66 = arith.remsi %arg18, %65 : i32
      %c0_i32_43 = arith.constant 0 : i32
      %67 = arith.cmpi ne, %66, %c0_i32_43 : i32
      %c0_i32_44 = arith.constant 0 : i32
      %68 = arith.cmpi slt, %66, %c0_i32_44 : i32
      %c0_i32_45 = arith.constant 0 : i32
      %69 = arith.cmpi slt, %65, %c0_i32_45 : i32
      %70 = arith.xori %68, %69 : i1
      %71 = arith.andi %70, %67 : i1
      %72 = arith.addi %66, %65 : i32
      %73 = arith.select %71, %72, %66 : i32
      %74 = arith.index_cast %arg18 : i32 to index
      %75 = memref.load %arg1[%74] : memref<2xi32, #tpu.memory_space<smem>>
      %c0_i32_46 = arith.constant 0 : i32
      %76 = tpu.memref_slice %arg2[%75, %c0_i32_46] : memref<16x32xf32, #tpu.memory_space<any>> -> memref<1x32xf32, #tpu.memory_space<any>>
      %c0_i32_47 = arith.constant 0 : i32
      %77 = tpu.memref_slice %arg10[%arg18, %c0_i32_47] : memref<8x32xf32, #tpu.memory_space<vmem>> -> memref<1x32xf32, #tpu.memory_space<vmem>>
      %78 = tpu.memref_slice %arg16[%73] : memref<2x!tpu.dma_semaphore, #tpu.memory_space<semaphore_mem>> -> memref<1x!tpu.dma_semaphore, #tpu.memory_space<semaphore_mem>>
      %79 = tpu.memref_squeeze %78 : memref<1x!tpu.dma_semaphore, #tpu.memory_space<semaphore_mem>> -> memref<!tpu.dma_semaphore, #tpu.memory_space<semaphore_mem>>
      tpu.wait_dma2 semaphore(%79 : memref<!tpu.dma_semaphore, #tpu.memory_space<semaphore_mem>>) src(%76 : memref<1x32xf32, #tpu.memory_space<any>>) dst(%77 : memref<1x32xf32, #tpu.memory_space<vmem>>)
      %c2_i32_48 = arith.constant 2 : i32
      %80 = arith.addi %arg18, %c2_i32_48 : i32
      %c2_i32_49 = arith.constant 2 : i32
      %81 = arith.cmpi slt, %80, %c2_i32_49 : i32
      %82 = arith.extui %81 : i1 to i32
      %c0_i32_50 = arith.constant 0 : i32
      %83 = arith.cmpi ne, %82, %c0_i32_50 : i32
      scf.if %83 {
        %c2_i32_51 = arith.constant 2 : i32
        %84 = arith.addi %arg18, %c2_i32_51 : i32
        %85 = arith.index_cast %84 : i32 to index
        %86 = memref.load %arg1[%85] : memref<2xi32, #tpu.memory_space<smem>>
        %c0_i32_52 = arith.constant 0 : i32
        %87 = tpu.memref_slice %arg2[%86, %c0_i32_52] : memref<16x32xf32, #tpu.memory_space<any>> -> memref<1x32xf32, #tpu.memory_space<any>>
        %c0_i32_53 = arith.constant 0 : i32
        %88 = tpu.memref_slice %arg10[%84, %c0_i32_53] : memref<8x32xf32, #tpu.memory_space<vmem>> -> memref<1x32xf32, #tpu.memory_space<vmem>>
        %89 = tpu.memref_slice %arg16[%73] : memref<2x!tpu.dma_semaphore, #tpu.memory_space<semaphore_mem>> -> memref<1x!tpu.dma_semaphore, #tpu.memory_space<semaphore_mem>>
        %90 = tpu.memref_squeeze %89 : memref<1x!tpu.dma_semaphore, #tpu.memory_space<semaphore_mem>> -> memref<!tpu.dma_semaphore, #tpu.memory_space<semaphore_mem>>
        tpu.enqueue_dma source(%87 : memref<1x32xf32, #tpu.memory_space<any>>) target(%88 : memref<1x32xf32, #tpu.memory_space<vmem>>) target_semaphore(%90 : memref<!tpu.dma_semaphore, #tpu.memory_space<semaphore_mem>>)
      } else {
      }
    }
    %c2_i32_12 = arith.constant 2 : i32
    %c0_i32_13 = arith.constant 0 : i32
    %23 = tpu.memref_slice %arg17[%c0_i32_13] : memref<5x!tpu.dma_semaphore, #tpu.memory_space<semaphore_mem>> -> memref<1x!tpu.dma_semaphore, #tpu.memory_space<semaphore_mem>>
    %24 = tpu.memref_squeeze %23 : memref<1x!tpu.dma_semaphore, #tpu.memory_space<semaphore_mem>> -> memref<!tpu.dma_semaphore, #tpu.memory_space<semaphore_mem>>
    tpu.wait_dma2 semaphore(%24 : memref<!tpu.dma_semaphore, #tpu.memory_space<semaphore_mem>>) src(%arg3 : memref<32x128xf32, #tpu.memory_space<any>>) dst(%arg11 : memref<32x128xf32, #tpu.memory_space<vmem>>)
    %c1_i32_14 = arith.constant 1 : i32
    %25 = tpu.memref_slice %arg17[%c1_i32_14] : memref<5x!tpu.dma_semaphore, #tpu.memory_space<semaphore_mem>> -> memref<1x!tpu.dma_semaphore, #tpu.memory_space<semaphore_mem>>
    %26 = tpu.memref_squeeze %25 : memref<1x!tpu.dma_semaphore, #tpu.memory_space<semaphore_mem>> -> memref<!tpu.dma_semaphore, #tpu.memory_space<semaphore_mem>>
    tpu.wait_dma2 semaphore(%26 : memref<!tpu.dma_semaphore, #tpu.memory_space<semaphore_mem>>) src(%arg4 : memref<1x128xf32, #tpu.memory_space<any>>) dst(%arg12 : memref<1x128xf32, #tpu.memory_space<vmem>>)
    %c2_i32_15 = arith.constant 2 : i32
    %27 = tpu.memref_slice %arg17[%c2_i32_15] : memref<5x!tpu.dma_semaphore, #tpu.memory_space<semaphore_mem>> -> memref<1x!tpu.dma_semaphore, #tpu.memory_space<semaphore_mem>>
    %28 = tpu.memref_squeeze %27 : memref<1x!tpu.dma_semaphore, #tpu.memory_space<semaphore_mem>> -> memref<!tpu.dma_semaphore, #tpu.memory_space<semaphore_mem>>
    tpu.wait_dma2 semaphore(%28 : memref<!tpu.dma_semaphore, #tpu.memory_space<semaphore_mem>>) src(%arg5 : memref<128x128xf32, #tpu.memory_space<any>>) dst(%arg13 : memref<128x128xf32, #tpu.memory_space<vmem>>)
    %c3_i32_16 = arith.constant 3 : i32
    %29 = tpu.memref_slice %arg17[%c3_i32_16] : memref<5x!tpu.dma_semaphore, #tpu.memory_space<semaphore_mem>> -> memref<1x!tpu.dma_semaphore, #tpu.memory_space<semaphore_mem>>
    %30 = tpu.memref_squeeze %29 : memref<1x!tpu.dma_semaphore, #tpu.memory_space<semaphore_mem>> -> memref<!tpu.dma_semaphore, #tpu.memory_space<semaphore_mem>>
    tpu.wait_dma2 semaphore(%30 : memref<!tpu.dma_semaphore, #tpu.memory_space<semaphore_mem>>) src(%arg6 : memref<1x128xf32, #tpu.memory_space<any>>) dst(%arg14 : memref<1x128xf32, #tpu.memory_space<vmem>>)
    %c4_i32_17 = arith.constant 4 : i32
    %31 = tpu.memref_slice %arg17[%c4_i32_17] : memref<5x!tpu.dma_semaphore, #tpu.memory_space<semaphore_mem>> -> memref<1x!tpu.dma_semaphore, #tpu.memory_space<semaphore_mem>>
    %32 = tpu.memref_squeeze %31 : memref<1x!tpu.dma_semaphore, #tpu.memory_space<semaphore_mem>> -> memref<!tpu.dma_semaphore, #tpu.memory_space<semaphore_mem>>
    tpu.wait_dma2 semaphore(%32 : memref<!tpu.dma_semaphore, #tpu.memory_space<semaphore_mem>>) src(%arg7 : memref<1x128xf32, #tpu.memory_space<any>>) dst(%arg15 : memref<1x128xf32, #tpu.memory_space<vmem>>)
    %c0_18 = arith.constant 0 : index
    %c0_19 = arith.constant 0 : index
    %33 = vector.load %arg10[%c0_18, %c0_19] : memref<8x32xf32, #tpu.memory_space<vmem>>, vector<8x32xf32>
    %c0_20 = arith.constant 0 : index
    %c0_21 = arith.constant 0 : index
    %34 = vector.load %arg11[%c0_20, %c0_21] : memref<32x128xf32, #tpu.memory_space<vmem>>, vector<32x128xf32>
    %cst_22 = arith.constant dense<0.000000e+00> : vector<8x128xf32>
    %35 = tpu.matmul %33, %34, %cst_22 {dimension_numbers = #tpu.dot_dimension_numbers<[1], [0], [0], [1], [0, 0, 1, 1], [], []>} : vector<8x32xf32>, vector<32x128xf32>, vector<8x128xf32> -> vector<8x128xf32>
    %c0_23 = arith.constant 0 : index
    %c0_24 = arith.constant 0 : index
    %36 = vector.load %arg12[%c0_23, %c0_24] : memref<1x128xf32, #tpu.memory_space<vmem>>, vector<1x128xf32>
    %37 = vector.broadcast %36 : vector<1x128xf32> to vector<8x128xf32>
    %38 = arith.addf %35, %37 : vector<8x128xf32>
    %cst_25 = arith.constant 0.000000e+00 : f32
    %39 = vector.broadcast %cst_25 : f32 to vector<8x128xf32>
    %40 = arith.cmpf ogt, %38, %39 : vector<8x128xf32>
    %cst_26 = arith.constant 0.00999999977 : f32
    %41 = vector.broadcast %cst_26 : f32 to vector<8x128xf32>
    %42 = arith.mulf %41, %38 : vector<8x128xf32>
    %43 = arith.select %40, %38, %42 : vector<8x128xi1>, vector<8x128xf32>
    %c0_27 = arith.constant 0 : index
    %c0_28 = arith.constant 0 : index
    %44 = vector.load %arg13[%c0_27, %c0_28] : memref<128x128xf32, #tpu.memory_space<vmem>>, vector<128x128xf32>
    %cst_29 = arith.constant dense<0.000000e+00> : vector<8x128xf32>
    %45 = tpu.matmul %43, %44, %cst_29 {dimension_numbers = #tpu.dot_dimension_numbers<[1], [0], [0], [1], [0, 0, 1, 1], [], []>} : vector<8x128xf32>, vector<128x128xf32>, vector<8x128xf32> -> vector<8x128xf32>
    %c0_30 = arith.constant 0 : index
    %c0_31 = arith.constant 0 : index
    %46 = vector.load %arg14[%c0_30, %c0_31] : memref<1x128xf32, #tpu.memory_space<vmem>>, vector<1x128xf32>
    %47 = vector.broadcast %46 : vector<1x128xf32> to vector<8x128xf32>
    %48 = arith.addf %45, %47 : vector<8x128xf32>
    %cst_32 = arith.constant 0.000000e+00 : f32
    %49 = vector.broadcast %cst_32 : f32 to vector<8x128xf32>
    %50 = arith.cmpf ogt, %48, %49 : vector<8x128xf32>
    %cst_33 = arith.constant 0.00999999977 : f32
    %51 = vector.broadcast %cst_33 : f32 to vector<8x128xf32>
    %52 = arith.mulf %51, %48 : vector<8x128xf32>
    %53 = arith.select %50, %48, %52 : vector<8x128xi1>, vector<8x128xf32>
    %c0_34 = arith.constant 0 : index
    %c0_35 = arith.constant 0 : index
    %54 = vector.load %arg15[%c0_34, %c0_35] : memref<1x128xf32, #tpu.memory_space<vmem>>, vector<1x128xf32>
    %55 = vector.broadcast %54 : vector<1x128xf32> to vector<8x128xf32>
    %56 = arith.mulf %53, %55 : vector<8x128xf32>
    %cst_36 = arith.constant dense<0.000000e+00> : vector<8xf32>
    %57 = vector.multi_reduction <add>, %56, %cst_36 [1] : vector<8x128xf32> to vector<8xf32>
    %58 = vector.shape_cast %57 : vector<8xf32> to vector<8x1xf32>
    %c0_37 = arith.constant 0 : index
    %59 = memref.load %arg8[%c0_37] : memref<1xf32, #tpu.memory_space<smem>>
    %60 = vector.broadcast %59 : f32 to vector<8x1xf32>
    %61 = arith.addf %58, %60 : vector<8x1xf32>
    %62 = tpu.transpose %61, [1, 0] : vector<8x1xf32> -> vector<1x8xf32>
    %c0_38 = arith.constant 0 : index
    %c0_39 = arith.constant 0 : index
    %63 = vector.load %arg9[%c0_38, %c0_39] : memref<1x8xf32, #tpu.memory_space<vmem>>, vector<1x8xf32>
    tpu.vector_store %arg9[%c0_38, %c0_39], %62 {strides = array<i32>} : memref<1x8xf32, #tpu.memory_space<vmem>>, vector<1x8xf32>,
    return
  }
  func.func @transform_6(%arg0: i32, %arg1: memref<2xi32, #tpu.memory_space<smem>>) -> i32 {
    %c0_i32 = arith.constant 0 : i32
    %c0_i32_0 = arith.constant 0 : i32
    return %c0_i32 : i32
  }
  func.func @transform_7(%arg0: i32, %arg1: memref<2xi32, #tpu.memory_space<smem>>) -> (i32, i32) {
    %c0_i32 = arith.constant 0 : i32
    %c0_i32_0 = arith.constant 0 : i32
    %c0_i32_1 = arith.constant 0 : i32
    return %c0_i32, %c0_i32_0 : i32, i32
  }
}

</mosaic_0001>

<llo_original>
// kernel: tpu_custom_call.1
$region0: #{tpu_custom_call.1}
  #allocation0 [shape = 'u32[]', space=smem, size = 0x4, offset = 0x4, fixed_abs, tag = 'smem constant byte address 0x4 - core index']
  #allocation1 [shape = 'u32[144,128]{1,0:T(1,128)}', space=vmem, size = 0x12000, scoped, tag = 'internal scratch']
  #allocation2 [shape = 'f32[8,32]{1,0:T(8,128)}', space=vmem, size = 0x1000, scoped, tag = 'scratch operand']
  #allocation3 [shape = 'f32[32,128]{1,0:T(8,128)}', space=vmem, size = 0x4000, scoped, tag = 'scratch operand']
  #allocation4 [shape = 'f32[1,128]{1,0:T(1,128)}', space=vmem, size = 0x200, scoped, tag = 'scratch operand']
  #allocation5 [shape = 'f32[128,128]{1,0:T(8,128)}', space=vmem, size = 0x10000, scoped, tag = 'scratch operand']
  #allocation6 [shape = 'f32[1,128]{1,0:T(1,128)}', space=vmem, size = 0x200, scoped, tag = 'scratch operand']
  #allocation7 [shape = 'f32[1,128]{1,0:T(1,128)}', space=vmem, size = 0x200, scoped, tag = 'scratch operand']
  #allocation8 [shape = 's32[2]{0}', space=sflag, size = 0x8, scoped, tag = 'scratch operand']
  #allocation9 [shape = 's32[5]{0}', space=sflag, size = 0x14, scoped, tag = 'scratch operand']
  #allocation10 [shape = 's32[1]{0}', space=sflag, size = 0x4, scoped, tag = 'scoped memory for tpu_custom_call.1']
  #allocation11 [shape = 'u8[512]{0}', space=smem, size = 0x200, scoped, tag = 'prefetched SMEM operand 0']
  #allocation12 [shape = 'f32[1]{0:T(128)S(6)}', space=smem, size = 0x200, scoped, tag = 'scoped memory for tpu_custom_call.1']
  #allocation15 [shape = 's32[]', space=sflag, size = 0x4, offset = 0, fixed_abs, tag = 'sflag constant byte address 0x0 - dummy sync flag']
  #allocation16 [shape = 's32[]', space=sflag, size = 0x4, offset = 0, fixed_abs, tag = 'sflag constant byte address 0x0 - dummy sync flag']
  #allocation17 [shape = 'u32[]', space=smem, size = 0x4, offset = 0x44, fixed_abs, tag = 'smem constant byte address 0x44 - assertion arg 0']
  #allocation18 [shape = 'u32[]', space=smem, size = 0x4, offset = 0x48, fixed_abs, tag = 'smem constant byte address 0x48 - assertion arg 1']
  #allocation19 [shape = 's32[]', space=sflag, size = 0x4, offset = 0, fixed_abs, tag = 'sflag constant byte address 0x0 - dummy sync flag']
  #allocation20 [shape = 's32[]', space=sflag, size = 0x4, offset = 0, fixed_abs, tag = 'sflag constant byte address 0x0 - dummy sync flag']
  #allocation21 [shape = 's32[]', space=sflag, size = 0x4, offset = 0, fixed_abs, tag = 'sflag constant byte address 0x0 - dummy sync flag']
  #allocation22 [shape = 's32[]', space=sflag, size = 0x4, offset = 0, fixed_abs, tag = 'sflag constant byte address 0x0 - dummy sync flag']
  #allocation23 [shape = 's32[]', space=sflag, size = 0x4, offset = 0, fixed_abs, tag = 'sflag constant byte address 0x0 - dummy sync flag']
  #allocation24 [shape = 's32[]', space=sflag, size = 0x4, offset = 0, fixed_abs, tag = 'sflag constant byte address 0x0 - dummy sync flag']
  #allocation25 [shape = 's32[]', space=sflag, size = 0x4, offset = 0, fixed_abs, tag = 'sflag constant byte address 0x0 - dummy sync flag']
  #allocation26 [shape = 's32[]', space=sflag, size = 0x4, offset = 0, fixed_abs, tag = 'sflag constant byte address 0x0 - dummy sync flag']
  #allocation27 [shape = 's32[]', space=sflag, size = 0x4, offset = 0, fixed_abs, tag = 'sflag constant byte address 0x0 - dummy sync flag']
  #allocation28 [shape = 's32[]', space=sflag, size = 0x4, offset = 0, fixed_abs, tag = 'sflag constant byte address 0x0 - dummy sync flag']
  #allocation29 [shape = 's32[]', space=sflag, size = 0x4, offset = 0, fixed_abs, tag = 'sflag constant byte address 0x0 - dummy sync flag']
  %s0 = inlined_call_operand.vmem [shape: s32[2], index: 0, kind: input, shape index: {}]
  %s1 = inlined_call_operand.hbm [shape: f32[16,32], index: 1, kind: input, shape index: {}]
  %s2 = inlined_call_operand.hbm [shape: f32[32,128], index: 2, kind: input, shape index: {}]
  %s3 = inlined_call_operand.vmem [shape: f32[1,128], index: 3, kind: input, shape index: {}]
  %s4 = inlined_call_operand.hbm [shape: f32[128,128], index: 4, kind: input, shape index: {}]
  %s5 = inlined_call_operand.vmem [shape: f32[1,128], index: 5, kind: input, shape index: {}]
  %s6 = inlined_call_operand.vmem [shape: f32[1,128], index: 6, kind: input, shape index: {}]
  %s7 = inlined_call_operand.<no memory space> [shape: f32[1], index: 7, kind: input, shape index: {}]
  %s8 = inlined_call_operand.hbm [shape: f32[1,8], index: 8, kind: output, shape index: {}]
  %s9 = sld [smem:[#allocation0]]
  $region135: #{tpu_custom_call.1} parent=0
    _
  %s11 = ssub.s32 1, %s9
  %s12 = scalar_select 0, %s11, %s9
  %s13 = sshll.u32 %s0, 4
  %s14 = int_to_ptr.vmem [resolvable:$true] %s13
  %16 = dma.vmem_to_smem %s14, 16, [#allocation11], [#allocation10]
  %17 = sst [smem:[#allocation12]] %s7
  %18 = dma.done [#allocation10], 16
  %19 = sfence
  $region1: #{tpu_custom_call.1} parent=0
    #allocation13 [shape = 'u8[512]{0}', space=vmem, size = 0x400, scoped, tag = 'output window, operand 0, single buffered']
    #allocation14 [shape = 's32[1]{0}', space=sflag, size = 0x4, scoped, tag = 'scoped memory for tpu_custom_call.1']
    %20 = vsyncpa [#allocation14], 0
    // Predicated region
    $region2: #{tpu_custom_call.1} parent=1 // pred_check
      _
    $region3: #{tpu_custom_call.1} parent=1 // pred_check_branch
      %22 = sbr.rel (0) target = $region5
    $region4: #{tpu_custom_call.1} parent=1 // pred_region
      _
    $region5: #{tpu_custom_call.1} parent=1 // pred_fallthru
      _
    // Predicated region
    $region6: #{tpu_custom_call.1} parent=1 // pred_check
      _
    $region7: #{tpu_custom_call.1} parent=1 // pred_check_branch
      %24 = sbr.rel target = $region9
    $region8: #{tpu_custom_call.1} parent=1 // pred_region
      %25 = sst [smem:[#allocation17]] [#allocation16]
      %26 = sst [smem:[#allocation18]] [#allocation15]
    $region9: #{tpu_custom_call.1} parent=1 // pred_fallthru
      _
    %28 = shalt.err (0)
    %s30 = sshll.u32 [#allocation3], 4
    %s31 = int_to_ptr.vmem [resolvable:$true] %s30
    %33 = dma.hbm_to_vmem [thread:$0]  %s2, 512, %s31, [#allocation9]
    %s34 = scalar_lea.sflag [#allocation9], 1
    %p36 = scmp.lt.u32.totalorder 1, 8
    %p37 = pneg %p36
    // Predicated region
    $region10: #{tpu_custom_call.1} parent=1 // pred_check
      _
    $region11: #{tpu_custom_call.1} parent=1 // pred_check_branch
      %39 = sbr.rel (%p36) target = $region13
    $region12: #{tpu_custom_call.1} parent=1 // pred_region
      %s54 = sand.u32 1, 7
      %p55 = scmp.eq.s32.totalorder %s54, 0
      %p56 = pneg %p55
      // Predicated region
      $region25: #{tpu_custom_call.1} parent=12 // pred_check
        _
      $region26: #{tpu_custom_call.1} parent=12 // pred_check_branch
        %58 = sbr.rel (%p55) target = $region28
      $region27: #{tpu_custom_call.1} parent=12 // pred_region
        %s59 = sand.u32 1, 7
        %s60 = ssub.s32 1, %s59
        %s61 = scalar_lea.vmem %s3, %s60
        %s62 = ssub.s32 1, %s59
        %s63 = scalar_lea.vmem [#allocation4], %s62
        %s64 = sshllo.u32 0, %s59
        loop: start=0, step=1, limit=1
        $region29: #{tpu_custom_call.1} parent=27 // loop_pre_header
          _
        $region30: #{tpu_custom_call.1} parent=27 // loop_header
          %s66 = sphi 0, %s70
          %p67 = scmp.ge.s32.totalorder %s66, 1
          %s71 = sphi %s61, %s61
          %s72 = sphi %s63, %s63
        $region31: #{tpu_custom_call.1} parent=27 // loop_header_branch
          %69 = sbr.rel (%p67) target = $region35
        $region32: #{tpu_custom_call.1} parent=27 // loop_body
          %v73 = vld [vmem:[%s71] sm:%s64]
          %74 = vst [vmem:[%s72] sm:%s64] %v73
        $region33: #{tpu_custom_call.1} parent=27 // loop_footer
          %s70 = sadd.s32 1, %s66
        $region34: #{tpu_custom_call.1} parent=27 // loop_footer_branch
          %65 = sbr.rel target = $region30
        $region35: #{tpu_custom_call.1} parent=27 // loop_exit
          _
      $region28: #{tpu_custom_call.1} parent=12 // pred_fallthru
        _
    $region13: #{tpu_custom_call.1} parent=1 // pred_fallthru
      _
    // Predicated region
    $region14: #{tpu_custom_call.1} parent=1 // pred_check
      %p40 = pneg %p36
    $region15: #{tpu_custom_call.1} parent=1 // pred_check_branch
      %42 = sbr.rel (%p40) target = $region17
    $region16: #{tpu_custom_call.1} parent=1 // pred_region
      %s43 = sshllo.u32 0, 1
      loop: start=0, step=1, limit=1
      $region18: #{tpu_custom_call.1} parent=16 // loop_pre_header
        _
      $region19: #{tpu_custom_call.1} parent=16 // loop_header
        %s45 = sphi 0, %s49
        %p46 = scmp.ge.s32.totalorder %s45, 1
        %s50 = sphi %s3, %s3
        %s51 = sphi [#allocation4], [#allocation4]
      $region20: #{tpu_custom_call.1} parent=16 // loop_header_branch
        %48 = sbr.rel (%p46) target = $region24
      $region21: #{tpu_custom_call.1} parent=16 // loop_body
        %v52 = vld [vmem:[%s50] sm:%s43]
        %53 = vst [vmem:[%s51] sm:%s43] %v52
      $region22: #{tpu_custom_call.1} parent=16 // loop_footer
        %s49 = sadd.s32 1, %s45
      $region23: #{tpu_custom_call.1} parent=16 // loop_footer_branch
        %44 = sbr.rel target = $region19
      $region24: #{tpu_custom_call.1} parent=16 // loop_exit
        _
    $region17: #{tpu_custom_call.1} parent=1 // pred_fallthru
      _
    // Predicated region
    $region36: #{tpu_custom_call.1} parent=1 // pred_check
      _
    $region37: #{tpu_custom_call.1} parent=1 // pred_check_branch
      %77 = sbr.rel (0) target = $region39
    $region38: #{tpu_custom_call.1} parent=1 // pred_region
      %78 = vsyncadd %s34, 16
    $region39: #{tpu_custom_call.1} parent=1 // pred_fallthru
      _
    %s79 = scalar_lea.sflag [#allocation9], 2
    // Predicated region
    $region40: #{tpu_custom_call.1} parent=1 // pred_check
      _
    $region41: #{tpu_custom_call.1} parent=1 // pred_check_branch
      %81 = sbr.rel target = $region43
    $region42: #{tpu_custom_call.1} parent=1 // pred_region
      %82 = sst [smem:[#allocation17]] [#allocation21]
      %83 = sst [smem:[#allocation18]] [#allocation20]
    $region43: #{tpu_custom_call.1} parent=1 // pred_fallthru
      _
    %85 = shalt.err (0)
    %s87 = sshll.u32 [#allocation5], 4
    %s88 = int_to_ptr.vmem [resolvable:$true] %s87
    %90 = dma.hbm_to_vmem [thread:$0]  %s4, 2048, %s88, %s79
    %s91 = scalar_lea.sflag [#allocation9], 3
    %p93 = scmp.lt.u32.totalorder 1, 8
    %p94 = pneg %p93
    // Predicated region
    $region44: #{tpu_custom_call.1} parent=1 // pred_check
      _
    $region45: #{tpu_custom_call.1} parent=1 // pred_check_branch
      %96 = sbr.rel (%p93) target = $region47
    $region46: #{tpu_custom_call.1} parent=1 // pred_region
      %s111 = sand.u32 1, 7
      %p112 = scmp.eq.s32.totalorder %s111, 0
      %p113 = pneg %p112
      // Predicated region
      $region59: #{tpu_custom_call.1} parent=46 // pred_check
        _
      $region60: #{tpu_custom_call.1} parent=46 // pred_check_branch
        %115 = sbr.rel (%p112) target = $region62
      $region61: #{tpu_custom_call.1} parent=46 // pred_region
        %s116 = sand.u32 1, 7
        %s117 = ssub.s32 1, %s116
        %s118 = scalar_lea.vmem %s5, %s117
        %s119 = ssub.s32 1, %s116
        %s120 = scalar_lea.vmem [#allocation6], %s119
        %s121 = sshllo.u32 0, %s116
        loop: start=0, step=1, limit=1
        $region63: #{tpu_custom_call.1} parent=61 // loop_pre_header
          _
        $region64: #{tpu_custom_call.1} parent=61 // loop_header
          %s123 = sphi 0, %s127
          %p124 = scmp.ge.s32.totalorder %s123, 1
          %s128 = sphi %s118, %s118
          %s129 = sphi %s120, %s120
        $region65: #{tpu_custom_call.1} parent=61 // loop_header_branch
          %126 = sbr.rel (%p124) target = $region69
        $region66: #{tpu_custom_call.1} parent=61 // loop_body
          %v130 = vld [vmem:[%s128] sm:%s121]
          %131 = vst [vmem:[%s129] sm:%s121] %v130
        $region67: #{tpu_custom_call.1} parent=61 // loop_footer
          %s127 = sadd.s32 1, %s123
        $region68: #{tpu_custom_call.1} parent=61 // loop_footer_branch
          %122 = sbr.rel target = $region64
        $region69: #{tpu_custom_call.1} parent=61 // loop_exit
          _
      $region62: #{tpu_custom_call.1} parent=46 // pred_fallthru
        _
    $region47: #{tpu_custom_call.1} parent=1 // pred_fallthru
      _
    // Predicated region
    $region48: #{tpu_custom_call.1} parent=1 // pred_check
      %p97 = pneg %p93
    $region49: #{tpu_custom_call.1} parent=1 // pred_check_branch
      %99 = sbr.rel (%p97) target = $region51
    $region50: #{tpu_custom_call.1} parent=1 // pred_region
      %s100 = sshllo.u32 0, 1
      loop: start=0, step=1, limit=1
      $region52: #{tpu_custom_call.1} parent=50 // loop_pre_header
        _
      $region53: #{tpu_custom_call.1} parent=50 // loop_header
        %s102 = sphi 0, %s106
        %p103 = scmp.ge.s32.totalorder %s102, 1
        %s107 = sphi %s5, %s5
        %s108 = sphi [#allocation6], [#allocation6]
      $region54: #{tpu_custom_call.1} parent=50 // loop_header_branch
        %105 = sbr.rel (%p103) target = $region58
      $region55: #{tpu_custom_call.1} parent=50 // loop_body
        %v109 = vld [vmem:[%s107] sm:%s100]
        %110 = vst [vmem:[%s108] sm:%s100] %v109
      $region56: #{tpu_custom_call.1} parent=50 // loop_footer
        %s106 = sadd.s32 1, %s102
      $region57: #{tpu_custom_call.1} parent=50 // loop_footer_branch
        %101 = sbr.rel target = $region53
      $region58: #{tpu_custom_call.1} parent=50 // loop_exit
        _
    $region51: #{tpu_custom_call.1} parent=1 // pred_fallthru
      _
    // Predicated region
    $region70: #{tpu_custom_call.1} parent=1 // pred_check
      _
    $region71: #{tpu_custom_call.1} parent=1 // pred_check_branch
      %134 = sbr.rel (0) target = $region73
    $region72: #{tpu_custom_call.1} parent=1 // pred_region
      %135 = vsyncadd %s91, 16
    $region73: #{tpu_custom_call.1} parent=1 // pred_fallthru
      _
    %s136 = scalar_lea.sflag [#allocation9], 4
    %p138 = scmp.lt.u32.totalorder 1, 8
    %p139 = pneg %p138
    // Predicated region
    $region74: #{tpu_custom_call.1} parent=1 // pred_check
      _
    $region75: #{tpu_custom_call.1} parent=1 // pred_check_branch
      %141 = sbr.rel (%p138) target = $region77
    $region76: #{tpu_custom_call.1} parent=1 // pred_region
      %s156 = sand.u32 1, 7
      %p157 = scmp.eq.s32.totalorder %s156, 0
      %p158 = pneg %p157
      // Predicated region
      $region89: #{tpu_custom_call.1} parent=76 // pred_check
        _
      $region90: #{tpu_custom_call.1} parent=76 // pred_check_branch
        %160 = sbr.rel (%p157) target = $region92
      $region91: #{tpu_custom_call.1} parent=76 // pred_region
        %s161 = sand.u32 1, 7
        %s162 = ssub.s32 1, %s161
        %s163 = scalar_lea.vmem %s6, %s162
        %s164 = ssub.s32 1, %s161
        %s165 = scalar_lea.vmem [#allocation7], %s164
        %s166 = sshllo.u32 0, %s161
        loop: start=0, step=1, limit=1
        $region93: #{tpu_custom_call.1} parent=91 // loop_pre_header
          _
        $region94: #{tpu_custom_call.1} parent=91 // loop_header
          %s168 = sphi 0, %s172
          %p169 = scmp.ge.s32.totalorder %s168, 1
          %s173 = sphi %s163, %s163
          %s174 = sphi %s165, %s165
        $region95: #{tpu_custom_call.1} parent=91 // loop_header_branch
          %171 = sbr.rel (%p169) target = $region99
        $region96: #{tpu_custom_call.1} parent=91 // loop_body
          %v175 = vld [vmem:[%s173] sm:%s166]
          %176 = vst [vmem:[%s174] sm:%s166] %v175
        $region97: #{tpu_custom_call.1} parent=91 // loop_footer
          %s172 = sadd.s32 1, %s168
        $region98: #{tpu_custom_call.1} parent=91 // loop_footer_branch
          %167 = sbr.rel target = $region94
        $region99: #{tpu_custom_call.1} parent=91 // loop_exit
          _
      $region92: #{tpu_custom_call.1} parent=76 // pred_fallthru
        _
    $region77: #{tpu_custom_call.1} parent=1 // pred_fallthru
      _
    // Predicated region
    $region78: #{tpu_custom_call.1} parent=1 // pred_check
      %p142 = pneg %p138
    $region79: #{tpu_custom_call.1} parent=1 // pred_check_branch
      %144 = sbr.rel (%p142) target = $region81
    $region80: #{tpu_custom_call.1} parent=1 // pred_region
      %s145 = sshllo.u32 0, 1
      loop: start=0, step=1, limit=1
      $region82: #{tpu_custom_call.1} parent=80 // loop_pre_header
        _
      $region83: #{tpu_custom_call.1} parent=80 // loop_header
        %s147 = sphi 0, %s151
        %p148 = scmp.ge.s32.totalorder %s147, 1
        %s152 = sphi %s6, %s6
        %s153 = sphi [#allocation7], [#allocation7]
      $region84: #{tpu_custom_call.1} parent=80 // loop_header_branch
        %150 = sbr.rel (%p148) target = $region88
      $region85: #{tpu_custom_call.1} parent=80 // loop_body
        %v154 = vld [vmem:[%s152] sm:%s145]
        %155 = vst [vmem:[%s153] sm:%s145] %v154
      $region86: #{tpu_custom_call.1} parent=80 // loop_footer
        %s151 = sadd.s32 1, %s147
      $region87: #{tpu_custom_call.1} parent=80 // loop_footer_branch
        %146 = sbr.rel target = $region83
      $region88: #{tpu_custom_call.1} parent=80 // loop_exit
        _
    $region81: #{tpu_custom_call.1} parent=1 // pred_fallthru
      _
    // Predicated region
    $region100: #{tpu_custom_call.1} parent=1 // pred_check
      _
    $region101: #{tpu_custom_call.1} parent=1 // pred_check_branch
      %179 = sbr.rel (0) target = $region103
    $region102: #{tpu_custom_call.1} parent=1 // pred_region
      %180 = vsyncadd %s136, 16
    $region103: #{tpu_custom_call.1} parent=1 // pred_fallthru
      _
    %vm181 = vcmask 259072
    %182 = vst.msk [vmem:[#allocation2 + $0x2] sm:$0x3f] %vm181, 0.0
    %s183 = sld [smem:[#allocation11]]
    %s184 = smul.addr %s183, 16
    %s185 = scalar_lea.hbm %s1, %s184
    // Predicated region
    $region104: #{tpu_custom_call.1} parent=1 // pred_check
      _
    $region105: #{tpu_custom_call.1} parent=1 // pred_check_branch
      %187 = sbr.rel target = $region107
    $region106: #{tpu_custom_call.1} parent=1 // pred_region
      %188 = sst [smem:[#allocation17]] [#allocation25]
      %189 = sst [smem:[#allocation18]] [#allocation24]
    $region107: #{tpu_custom_call.1} parent=1 // pred_fallthru
      _
    %191 = shalt.err (0)
    %s193 = sshll.u32 [#allocation2], 4
    %s194 = int_to_ptr.vmem [resolvable:$true] %s193
    %196 = dma.hbm_to_vmem [thread:$0]  %s185, 16, %s194, [#allocation8]
    %s197 = sld [smem:[#allocation11 + $0x1]]
    %s198 = smul.addr %s197, 16
    %s199 = scalar_lea.hbm %s1, %s198
    %s200 = scalar_lea.vmem [#allocation2], 1
    %s201 = scalar_lea.sflag [#allocation8], 1
    // Predicated region
    $region108: #{tpu_custom_call.1} parent=1 // pred_check
      _
    $region109: #{tpu_custom_call.1} parent=1 // pred_check_branch
      %203 = sbr.rel target = $region111
    $region110: #{tpu_custom_call.1} parent=1 // pred_region
      %204 = sst [smem:[#allocation17]] [#allocation27]
      %205 = sst [smem:[#allocation18]] [#allocation26]
    $region111: #{tpu_custom_call.1} parent=1 // pred_fallthru
      _
    %207 = shalt.err (0)
    %s209 = sshll.u32 %s200, 4
    %s210 = int_to_ptr.vmem [resolvable:$true] %s209
    %212 = dma.hbm_to_vmem [thread:$0]  %s199, 16, %s210, %s201
    loop: start=0, step=1, limit=2
    $region112: #{tpu_custom_call.1} parent=1 // loop_pre_header
      _
    $region113: #{tpu_custom_call.1} parent=1 // loop_header
      %s214 = sphi 0, %s218
      %p215 = scmp.ge.s32.totalorder %s214, 2
    $region114: #{tpu_custom_call.1} parent=1 // loop_header_branch
      %217 = sbr.rel (%p215) target = $region118
    $region115: #{tpu_custom_call.1} parent=1 // loop_body
      %p219 = scmp.lt.s32.totalorder %s214, 0
      %s220 = ssub.s32 0, %s214
      %s221 = scalar_select %p219, %s220, %s214
      %s222 = sand.u32 %s221, 1
      %s223 = ssub.s32 0, %s222
      %s224 = scalar_select %p219, %s223, %s222
      %p225 = scmp.ne.s32.totalorder %s224, 0
      %p226 = scmp.lt.s32.totalorder %s224, 0
      %p227 = pnand %p226, %p225
      %p228 = pneg %p227
      %s229 = sadd.s32 %s224, 2
      %s230 = scalar_select %p228, %s229, %s224
      %s231 = sld [smem:[#allocation11 + %s214]]
      %s232 = scalar_lea.sflag [#allocation8], %s230
      %s233 = smul.u32 1, 1
      %s234 = sshll.u32 %s233, 4
      %235 = dma.done %s232, %s234
      %s236 = sadd.s32 %s214, 2
      %p237 = scmp.lt.s32.totalorder %s236, 2
      // Predicated region
      $region119: #{tpu_custom_call.1} parent=115 // pred_check
        %p238 = pneg %p237
      $region120: #{tpu_custom_call.1} parent=115 // pred_check_branch
        %240 = sbr.rel (%p238) target = $region122
      $region121: #{tpu_custom_call.1} parent=115 // pred_region
        %s241 = sld [smem:[#allocation11 + %s236]]
        %s242 = smul.addr %s241, 16
        %s243 = scalar_lea.hbm %s1, %s242
        %s244 = scalar_lea.vmem [#allocation2], %s236
        // Predicated region
        $region123: #{tpu_custom_call.1} parent=121 // pred_check
          _
        $region124: #{tpu_custom_call.1} parent=121 // pred_check_branch
          %246 = sbr.rel target = $region126
        $region125: #{tpu_custom_call.1} parent=121 // pred_region
          %247 = sst [smem:[#allocation17]] [#allocation29]
          %248 = sst [smem:[#allocation18]] [#allocation28]
        $region126: #{tpu_custom_call.1} parent=121 // pred_fallthru
          _
        %250 = shalt.err (0)
        %s252 = sshll.u32 %s244, 4
        %s253 = int_to_ptr.vmem [resolvable:$true] %s252
        %255 = dma.hbm_to_vmem [thread:$0]  %s243, 16, %s253, %s232
      $region122: #{tpu_custom_call.1} parent=115 // pred_fallthru
        _
    $region116: #{tpu_custom_call.1} parent=1 // loop_footer
      %s218 = sadd.s32 1, %s214
    $region117: #{tpu_custom_call.1} parent=1 // loop_footer_branch
      %213 = sbr.rel target = $region113
    $region118: #{tpu_custom_call.1} parent=1 // loop_exit
      _
    %s256 = smul.u32 32, 1
    %s257 = sshll.u32 %s256, 4
    %258 = dma.done [#allocation9], %s257
    %s259 = smul.u32 1, 1
    %s260 = sshll.u32 %s259, 4
    %261 = dma.done %s34, %s260
    %s262 = smul.u32 128, 1
    %s263 = sshll.u32 %s262, 4
    %264 = dma.done %s79, %s263
    %s265 = sshll.u32 %s259, 4
    %266 = dma.done %s91, %s265
    %s267 = sshll.u32 %s259, 4
    %268 = dma.done %s136, %s267
    %v269 = vld [vmem:[#allocation2] sm:$0xff]
    %v270 = vld [vmem:[#allocation3] sm:$0xff]
    %v271 = vld [vmem:[#allocation3 + $0x8] sm:$0xff]
    %v272 = vld [vmem:[#allocation3 + $0x10] sm:$0xff]
    %v273 = vld [vmem:[#allocation3 + $0x18] sm:$0xff]
    %v274 = vld [vmem:[#allocation4] sm:$0x1]
    %v276 = vlaneseq
    %v277 = vshrl.u32 %v276, 7
    %v278 = vsub.s32 0, %v277
    %v279 = vrot.slane %v274, %v278
    %vm281 = vcmask 261120
    %v283 = vsel %vm281, %v269, 0
    %285 = vmatprep.subr.mxu0 0.0
    %286 = vmatpush1.msra.mxu0 %v270
    %287 = vmatprep.subr.mxu0 0.0
    %288 = vmatpush1.msra.mxu0 %v271
    %289 = vmatprep.subr.mxu0 0.0
    %290 = vmatpush1.msra.mxu0 %v272
    %291 = vmatprep.subr.mxu0 0.0
    %292 = vmatpush1.msra.mxu0 %v273
    %293 = vmatprep.subr.mxu0 0.0
    %294 = vmatpush1.msra.mxu0 0.0
    %295 = vmatprep.subr.mxu0 0.0
    %296 = vmatpush1.msra.mxu0 0.0
    %297 = vmatprep.subr.mxu0 0.0
    %298 = vmatpush1.msra.mxu0 0.0
    %299 = vmatprep.subr.mxu0 0.0
    %300 = vmatpush1.msra.mxu0 0.0
    %301 = vmatprep.subr.mxu0 0.0
    %302 = vmatpush1.msra.mxu0 0.0
    %303 = vmatprep.subr.mxu0 0.0
    %304 = vmatpush1.msra.mxu0 0.0
    %305 = vmatprep.subr.mxu0 0.0
    %306 = vmatpush1.msra.mxu0 0.0
    %307 = vmatprep.subr.mxu0 0.0
    %308 = vmatpush1.msra.mxu0 0.0
    %309 = vmatprep.subr.mxu0 0.0
    %310 = vmatpush1.msra.mxu0 0.0
    %311 = vmatprep.subr.mxu0 0.0
    %312 = vmatpush1.msra.mxu0 0.0
    %313 = vmatprep.subr.mxu0 0.0
    %314 = vmatpush1.msra.mxu0 0.0
    %315 = vmatprep.subr.mxu0 0.0
    %316 = vmatpush1.msra.mxu0 0.0
    %317 = vmatprep.subr.mxu0 0.0
    %318 = vmatpush1.msra.mxu0 0.0
    %319 = vmatprep.subr.mxu0 0.0
    %320 = vmatpush1.msra.mxu0 0.0
    %321 = vmatprep.subr.mxu0 0.0
    %322 = vmatpush1.msra.mxu0 0.0
    %323 = vmatprep.subr.mxu0 0.0
    %324 = vmatpush1.msra.mxu0 0.0
    %325 = vmatprep.subr.mxu0 0.0
    %326 = vmatpush1.msra.mxu0 0.0
    %327 = vmatprep.subr.mxu0 0.0
    %328 = vmatpush1.msra.mxu0 0.0
    %329 = vmatprep.subr.mxu0 0.0
    %330 = vmatpush1.msra.mxu0 0.0
    %331 = vmatprep.subr.mxu0 0.0
    %332 = vmatpush1.msra.mxu0 0.0
    %333 = vmatprep.subr.mxu0 0.0
    %334 = vmatpush1.msra.mxu0 0.0
    %335 = vmatprep.subr.mxu0 0.0
    %336 = vmatpush1.msra.mxu0 0.0
    %337 = vmatprep.subr.mxu0 0.0
    %338 = vmatpush1.msra.mxu0 0.0
    %339 = vmatprep.subr.mxu0 0.0
    %340 = vmatpush1.msra.mxu0 0.0
    %341 = vmatprep.subr.mxu0 0.0
    %342 = vmatpush1.msra.mxu0 0.0
    %343 = vmatprep.subr.mxu0 0.0
    %344 = vmatpush1.msra.mxu0 0.0
    %345 = vmatprep.subr.mxu0 0.0
    %346 = vmatpush1.msra.mxu0 0.0
    %347 = vmatprep.subr.mxu0 0.0
    %348 = vmatpush1.msra.mxu0 0.0
    %349 = vmatprep.mubr.f32.mxu0 0.0
    %350 = vmatmul.mubr.f32.gmra.mrb[0].mxu0 %v283
    %v351 = vpop.f32.mrb[0].mxu0
    %v352 = vadd.f32 %v279, %v351
    %v353 = vpop.f32.mrb[0].mxu0
    %354 = vdwg.mxu0
    %vm355 = vcmp.gt.f32.partialorder %v352, 0.0
    %v356 = vmul.f32 %v352, 0.01
    %v357 = vsel %vm355, %v352, %v356
    %v358 = vld [vmem:[#allocation5] sm:$0xff]
    %v359 = vld [vmem:[#allocation5 + $0x8] sm:$0xff]
    %v360 = vld [vmem:[#allocation5 + $0x10] sm:$0xff]
    %v361 = vld [vmem:[#allocation5 + $0x18] sm:$0xff]
    %v362 = vld [vmem:[#allocation5 + $0x20] sm:$0xff]
    %v363 = vld [vmem:[#allocation5 + $0x28] sm:$0xff]
    %v364 = vld [vmem:[#allocation5 + $0x30] sm:$0xff]
    %v365 = vld [vmem:[#allocation5 + $0x38] sm:$0xff]
    %v366 = vld [vmem:[#allocation5 + $0x40] sm:$0xff]
    %v367 = vld [vmem:[#allocation5 + $0x48] sm:$0xff]
    %v368 = vld [vmem:[#allocation5 + $0x50] sm:$0xff]
    %v369 = vld [vmem:[#allocation5 + $0x58] sm:$0xff]
    %v370 = vld [vmem:[#allocation5 + $0x60] sm:$0xff]
    %v371 = vld [vmem:[#allocation5 + $0x68] sm:$0xff]
    %v372 = vld [vmem:[#allocation5 + $0x70] sm:$0xff]
    %v373 = vld [vmem:[#allocation5 + $0x78] sm:$0xff]
    %v374 = vld [vmem:[#allocation6] sm:$0x1]
    %v376 = vlaneseq
    %v377 = vshrl.u32 %v376, 7
    %v378 = vsub.s32 0, %v377
    %v379 = vrot.slane %v374, %v378
    %381 = vmatprep.subr.mxu0 0.0
    %382 = vmatpush1.msra.mxu0 %v358
    %383 = vmatprep.subr.mxu0 0.0
    %384 = vmatpush1.msra.mxu0 %v359
    %385 = vmatprep.subr.mxu0 0.0
    %386 = vmatpush1.msra.mxu0 %v360
    %387 = vmatprep.subr.mxu0 0.0
    %388 = vmatpush1.msra.mxu0 %v361
    %389 = vmatprep.subr.mxu0 0.0
    %390 = vmatpush1.msra.mxu0 %v362
    %391 = vmatprep.subr.mxu0 0.0
    %392 = vmatpush1.msra.mxu0 %v363
    %393 = vmatprep.subr.mxu0 0.0
    %394 = vmatpush1.msra.mxu0 %v364
    %395 = vmatprep.subr.mxu0 0.0
    %396 = vmatpush1.msra.mxu0 %v365
    %397 = vmatprep.subr.mxu0 0.0
    %398 = vmatpush1.msra.mxu0 %v366
    %399 = vmatprep.subr.mxu0 0.0
    %400 = vmatpush1.msra.mxu0 %v367
    %401 = vmatprep.subr.mxu0 0.0
    %402 = vmatpush1.msra.mxu0 %v368
    %403 = vmatprep.subr.mxu0 0.0
    %404 = vmatpush1.msra.mxu0 %v369
    %405 = vmatprep.subr.mxu0 0.0
    %406 = vmatpush1.msra.mxu0 %v370
    %407 = vmatprep.subr.mxu0 0.0
    %408 = vmatpush1.msra.mxu0 %v371
    %409 = vmatprep.subr.mxu0 0.0
    %410 = vmatpush1.msra.mxu0 %v372
    %411 = vmatprep.subr.mxu0 0.0
    %412 = vmatpush1.msra.mxu0 %v373
    %413 = vmatprep.subr.mxu0 0.0
    %414 = vmatpush1.msra.mxu0 0.0
    %415 = vmatprep.subr.mxu0 0.0
    %416 = vmatpush1.msra.mxu0 0.0
    %417 = vmatprep.subr.mxu0 0.0
    %418 = vmatpush1.msra.mxu0 0.0
    %419 = vmatprep.subr.mxu0 0.0
    %420 = vmatpush1.msra.mxu0 0.0
    %421 = vmatprep.subr.mxu0 0.0
    %422 = vmatpush1.msra.mxu0 0.0
    %423 = vmatprep.subr.mxu0 0.0
    %424 = vmatpush1.msra.mxu0 0.0
    %425 = vmatprep.subr.mxu0 0.0
    %426 = vmatpush1.msra.mxu0 0.0
    %427 = vmatprep.subr.mxu0 0.0
    %428 = vmatpush1.msra.mxu0 0.0
    %429 = vmatprep.subr.mxu0 0.0
    %430 = vmatpush1.msra.mxu0 0.0
    %431 = vmatprep.subr.mxu0 0.0
    %432 = vmatpush1.msra.mxu0 0.0
    %433 = vmatprep.subr.mxu0 0.0
    %434 = vmatpush1.msra.mxu0 0.0
    %435 = vmatprep.subr.mxu0 0.0
    %436 = vmatpush1.msra.mxu0 0.0
    %437 = vmatprep.subr.mxu0 0.0
    %438 = vmatpush1.msra.mxu0 0.0
    %439 = vmatprep.subr.mxu0 0.0
    %440 = vmatpush1.msra.mxu0 0.0
    %441 = vmatprep.subr.mxu0 0.0
    %442 = vmatpush1.msra.mxu0 0.0
    %443 = vmatprep.subr.mxu0 0.0
    %444 = vmatpush1.msra.mxu0 0.0
    %445 = vmatprep.mubr.f32.mxu0 0.0
    %446 = vmatmul.mubr.f32.gmra.mrb[0].mxu0 %v357
    %v447 = vpop.f32.mrb[0].mxu0
    %v448 = vadd.f32 %v379, %v447
    %v449 = vpop.f32.mrb[0].mxu0
    %450 = vdwg.mxu0
    %vm451 = vcmp.gt.f32.partialorder %v448, 0.0
    %v452 = vmul.f32 %v448, 0.01
    %v453 = vsel %vm451, %v448, %v452
    %v454 = vld [vmem:[#allocation7] sm:$0x1]
    %v456 = vlaneseq
    %v457 = vshrl.u32 %v456, 7
    %v458 = vsub.s32 0, %v457
    %v459 = vrot.slane %v454, %v458
    %v461 = vmul.f32 %v453, %v459
    %462 = vadd.xlane.f32.xlu0 %v461
    %v463 = vpop.xlane.xlu0 %462
    %s464 = sld [smem:[#allocation12]]
    %v465 = vstv %s464
    %v466 = vadd.f32 %v463, %v465
    %467 = vxpose.xlu0.b32.start [1/16] %v466, 128
    %468 = vxpose.xlu0.b32.cont [2/16] 0.0, 128
    %469 = vxpose.xlu0.b32.cont [3/16] 0.0, 128
    %470 = vxpose.xlu0.b32.cont [4/16] 0.0, 128
    %471 = vxpose.xlu0.b32.cont [5/16] 0.0, 128
    %472 = vxpose.xlu0.b32.cont [6/16] 0.0, 128
    %473 = vxpose.xlu0.b32.cont [7/16] 0.0, 128
    %474 = vxpose.xlu0.b32.cont [8/16] 0.0, 128
    %475 = vxpose.xlu0.b32.cont [9/16] 0.0, 128
    %476 = vxpose.xlu0.b32.cont [10/16] 0.0, 128
    %477 = vxpose.xlu0.b32.cont [11/16] 0.0, 128
    %478 = vxpose.xlu0.b32.cont [12/16] 0.0, 128
    %479 = vxpose.xlu0.b32.cont [13/16] 0.0, 128
    %480 = vxpose.xlu0.b32.cont [14/16] 0.0, 128
    %481 = vxpose.xlu0.b32.cont [15/16] 0.0, 128
    %482 = vxpose.xlu0.b32.end [16/16] 0.0, 128
    %v483 = vpop.trf.xlu0
    %v484 = vpop.trf.xlu0
    %v485 = vpop.trf.xlu0
    %v486 = vpop.trf.xlu0
    %v487 = vpop.trf.xlu0
    %v488 = vpop.trf.xlu0
    %v489 = vpop.trf.xlu0
    %v490 = vpop.trf.xlu0
    %v491 = vpop.trf.xlu0
    %v492 = vpop.trf.xlu0
    %v493 = vpop.trf.xlu0
    %v494 = vpop.trf.xlu0
    %v495 = vpop.trf.xlu0
    %v496 = vpop.trf.xlu0
    %v497 = vpop.trf.xlu0
    %v498 = vpop.trf.xlu0
    %vm499 = vcmask 57344
    %500 = vst.msk [vmem:[#allocation13] sm:$0x1] %vm499, %v483
    // Predicated region
    $region127: #{tpu_custom_call.1} parent=1 // pred_check
      _
    $region128: #{tpu_custom_call.1} parent=1 // pred_check_branch
      %502 = sbr.rel (0) target = $region130
    $region129: #{tpu_custom_call.1} parent=1 // pred_region
      %s504 = ssub.s32 16, 16
      %505 = vsyncadd [#allocation14], %s504
      %s507 = sshll.u32 [#allocation13], 4
      %s508 = int_to_ptr.vmem [resolvable:$true] %s507
      %510 = dma.vmem_to_hbm [thread:$0]  %s508, 16, %s8, [#allocation14]
    $region130: #{tpu_custom_call.1} parent=1 // pred_fallthru
      _
    // Predicated region
    $region131: #{tpu_custom_call.1} parent=1 // pred_check
      _
    $region132: #{tpu_custom_call.1} parent=1 // pred_check_branch
      %512 = sbr.rel (0) target = $region134
    $region133: #{tpu_custom_call.1} parent=1 // pred_region
      %513 = dma.done [#allocation14], 16
    $region134: #{tpu_custom_call.1} parent=1 // pred_fallthru
      _
    %514 = vsyncpa [#allocation14], 1
  %515 = vsyncmov [#allocation8]
  %s516 = vpop.sfrf %515
  %p517 = scmp.eq.s32.totalorder %s516, 0
  %p518 = pneg %p517
  %520 = shalt.err (%p518)
  %s521 = scalar_lea.sflag [#allocation8], 1
  %522 = vsyncmov %s521
  %s523 = vpop.sfrf %522
  %p524 = scmp.eq.s32.totalorder %s523, 0
  %p525 = pneg %p524
  %527 = shalt.err (%p525)
  %528 = vsyncmov [#allocation9]
  %s529 = vpop.sfrf %528
  %p530 = scmp.eq.s32.totalorder %s529, 0
  %p531 = pneg %p530
  %533 = shalt.err (%p531)
  %s534 = scalar_lea.sflag [#allocation9], 1
  %535 = vsyncmov %s534
  %s536 = vpop.sfrf %535
  %p537 = scmp.eq.s32.totalorder %s536, 0
  %p538 = pneg %p537
  %540 = shalt.err (%p538)
  %s541 = scalar_lea.sflag [#allocation9], 2
  %542 = vsyncmov %s541
  %s543 = vpop.sfrf %542
  %p544 = scmp.eq.s32.totalorder %s543, 0
  %p545 = pneg %p544
  %547 = shalt.err (%p545)
  %s548 = scalar_lea.sflag [#allocation9], 3
  %549 = vsyncmov %s548
  %s550 = vpop.sfrf %549
  %p551 = scmp.eq.s32.totalorder %s550, 0
  %p552 = pneg %p551
  %554 = shalt.err (%p552)
  %s555 = scalar_lea.sflag [#allocation9], 4
  %556 = vsyncmov %s555
  %s557 = vpop.sfrf %556
  %p558 = scmp.eq.s32.totalorder %s557, 0
  %p559 = pneg %p558
  %561 = shalt.err (%p559)

</llo_original>
